<compile_context>
chip_gen: v7x
topology: tpu7x:2x2x1
jax: 0.10.0
libtpu: 0.0.40
codegen_flags: <defaults>
</compile_context>

<pallas_src>
import functools
import math

import jax
import jax.numpy as jnp
from jax import lax
from jax.experimental import pallas as pl
from jax.experimental.pallas import tpu as pltpu


def _label_smoothing_kernel(x_ref, tgt_ref, out_ref, *, n_rows, row_tile,
                            padding_idx, confidence, smooth_val, row_entropy):
    i = pl.program_id(0)

    x = x_ref[...]                              # (T, V) in input dtype (no upcast pass)
    tgt = tgt_ref[...]                          # (T, 1) int32
    t, v = x.shape

    # Per-row validity: ragged-tail rows and rows whose target is the padding
    # index contribute zero loss.  Mask only at (T, 1) granularity.
    local_row = lax.broadcasted_iota(jnp.int32, (t, 1), 0)
    valid = (i * row_tile + local_row) < n_rows            # (T, 1)
    nonpad = jnp.logical_and(valid, tgt != padding_idx)    # (T, 1)

    # sum_j x_ij, accumulated in f32.
    sum_x = jnp.sum(x, axis=-1, keepdims=True, dtype=jnp.float32)        # (T, 1)

    # x[i, target[i]] via iota compare/select (target varies per row).
    col = lax.broadcasted_iota(jnp.int32, (t, v), 1)                      # (T, V)
    x_lbl = jnp.sum(jnp.where(col == tgt, x, jnp.zeros_like(x)),
                    axis=-1, keepdims=True, dtype=jnp.float32)            # (T, 1)

    # x[i, padding_idx]: padding_idx is a compile-time constant -> read the
    # single column directly instead of a full-width masked reduction.
    x_pad = x_ref[:, pl.ds(padding_idx, 1)].astype(jnp.float32)           # (T, 1)

    cross = (smooth_val * sum_x
             + (confidence - smooth_val) * x_lbl
             - smooth_val * x_pad)                                        # (T, 1)

    # Single (T, 1) select masks out invalid rows (discards any tail garbage).
    row_loss = jnp.where(nonpad, row_entropy - cross, 0.0)

    out_ref[...] = row_loss.astype(out_ref.dtype)


def label_smoothing_loss(x, target, *, size, padding_idx, smoothing=0.0,
                         row_tile=None, vmem_limit_bytes=None):
    """x: (N, size) log-probabilities. target: (N,) int labels. Returns scalar loss."""
    n_rows, v = x.shape
    assert v == size, "x.shape[1] must equal `size`"
    assert size > 2, "smoothing/(size-2) requires size > 2 (same failure mode as PyTorch)"

    confidence = 1.0 - smoothing
    smooth_val = smoothing / (size - 2)

    def _xlogy(p):
        return p * math.log(p) if p > 0.0 else 0.0

    # Per contributing row: sum_j t_ij * log(t_ij) -- a compile-time constant.
    row_entropy = _xlogy(confidence) + (size - 2) * _xlogy(smooth_val)

    # VMEM budget: ~3/4 of physical capacity, capped for v7x's 64 MiB VMEM
    # while still allowing ~96 MiB scoped on v5e/v6e (128 MiB physical).
    if vmem_limit_bytes is None:
        try:
            cap = int(pltpu.get_tpu_info().vmem_capacity_bytes)
        except Exception:
            cap = 64 * 1024 * 1024
        vmem_limit_bytes = min((cap * 3) // 4, 112 * 1024 * 1024)

    # Memory-bound streaming kernel: pick the biggest row tile that fits the
    # budget (double-buffered x DMA + one f32-wide live (T, V) temp).
    if row_tile is None:
        in_bytes = jnp.dtype(x.dtype).itemsize
        bytes_per_row = v * (2 * in_bytes + 4) + 64
        budget = (vmem_limit_bytes * 3) // 4
        row_tile = int(budget // bytes_per_row)
        row_tile = max(8, min(1024, (row_tile // 8) * 8))
    # For very large vocabularies (V >= ~32K) a second ('arbitrary') vocab grid
    # axis with a (row_tile, 1) VMEM accumulator would keep row_tile large; not
    # needed at these sizes.

    # Clamp to the problem size, but keep >= 2 grid blocks whenever possible so
    # the 'parallel' axis can be sharded across both TensorCores on v7x.
    if row_tile >= n_rows:
        if n_rows > 8:
            row_tile = max(8, ((pl.cdiv(n_rows, 2) + 7) // 8) * 8)
            if row_tile >= n_rows:
                row_tile = n_rows
        else:
            row_tile = n_rows
    else:
        row_tile = max(8, (row_tile // 8) * 8)

    grid = (pl.cdiv(n_rows, row_tile),)       # ragged tail handled in-kernel

    target2 = target.astype(jnp.int32).reshape(n_rows, 1)

    kernel = functools.partial(
        _label_smoothing_kernel,
        n_rows=int(n_rows),
        row_tile=int(row_tile),
        padding_idx=int(padding_idx),
        confidence=float(confidence),
        smooth_val=float(smooth_val),
        row_entropy=float(row_entropy),
    )

    per_row = pl.pallas_call(
        kernel,
        out_shape=jax.ShapeDtypeStruct((n_rows, 1), jnp.float32),
        grid_spec=pltpu.PrefetchScalarGridSpec(
            num_scalar_prefetch=0,
            grid=grid,
            in_specs=[
                pl.BlockSpec((row_tile, v), lambda i: (i, 0)),   # x tile
                pl.BlockSpec((row_tile, 1), lambda i: (i, 0)),   # target tile
            ],
            out_specs=pl.BlockSpec((row_tile, 1), lambda i: (i, 0)),
        ),
        compiler_params=pltpu.CompilerParams(
            dimension_semantics=("parallel",),
            vmem_limit_bytes=int(vmem_limit_bytes)),
    )(x, target2)

    return jnp.sum(per_row)


if __name__ == "__main__":
    # Small shapes consistent with the module: N = batch*seq rows, vocab `size`.
    # 18 rows -> 2 grid blocks of 16 with a masked ragged tail.
    batch, seq, vocab = 2, 9, 128
    n_rows = batch * seq
    padding_idx = 0
    smoothing = 0.1

    key = jax.random.PRNGKey(0)
    k1, k2 = jax.random.split(key)
    logits = jax.random.normal(k1, (n_rows, vocab), dtype=jnp.float32)
    x = jax.nn.log_softmax(logits, axis=-1)                 # KLDivLoss expects log-probs
    target = jax.random.randint(k2, (n_rows,), 1, vocab, dtype=jnp.int32)
    target = target.at[3].set(padding_idx)                  # exercise row masking
    target = target.at[12].set(padding_idx)

    loss = label_smoothing_loss(
        x, target, size=vocab, padding_idx=padding_idx, smoothing=smoothing)
    jax.block_until_ready(loss)

    # Pure-JAX reference mirroring the PyTorch module exactly.
    confidence = 1.0 - smoothing
    true_dist = jnp.full((n_rows, vocab), smoothing / (vocab - 2), dtype=jnp.float32)
    true_dist = true_dist.at[jnp.arange(n_rows), target].set(confidence)
    true_dist = true_dist.at[:, padding_idx].set(0.0)
    true_dist = jnp.where((target == padding_idx)[:, None], 0.0, true_dist)
    safe_log = jnp.log(jnp.where(true_dist > 0, true_dist, 1.0))
    ref = jnp.sum(jnp.where(true_dist > 0, true_dist * (safe_log - x), 0.0))

    assert jnp.allclose(loss, ref, atol=1e-4, rtol=1e-4), (
        f"mismatch: kernel={float(loss)} ref={float(ref)}")

    print("KERNEL_OK")
</pallas_src>

<mosaic_0001>
module attributes {stable_mosaic.version = 11 : i64} {
  func.func @_label_smoothing_kernel(%arg0: i32, %arg1: memref<16x128xf32, #tpu.memory_space<vmem>>, %arg2: memref<16x1xi32, #tpu.memory_space<vmem>>, %arg3: memref<16x1xf32, #tpu.memory_space<vmem>>) attributes {dimension_semantics = [#tpu.dimension_semantics<parallel>], iteration_bounds = array<i64: 2>, scalar_prefetch = 0 : i64, scratch_operands = 0 : i64, tpu.core_type = #tpu.core_type<tc>, window_params = [{transform_indices = @transform_0, window_bounds = array<i64: 16, 128>}, {transform_indices = @transform_1, window_bounds = array<i64: 16, 1>}, {transform_indices = @transform_2, window_bounds = array<i64: 16, 1>}]} {
    %c0 = arith.constant 0 : index
    %c0_0 = arith.constant 0 : index
    %0 = vector.load %arg1[%c0, %c0_0] : memref<16x128xf32, #tpu.memory_space<vmem>>, vector<16x128xf32>
    %c0_1 = arith.constant 0 : index
    %c0_2 = arith.constant 0 : index
    %1 = vector.load %arg2[%c0_1, %c0_2] : memref<16x1xi32, #tpu.memory_space<vmem>>, vector<16x1xi32>
    %2 = tpu.iota {dimensions = array<i32: 0>} : vector<16x1xi32>
    %c16_i32 = arith.constant 16 : i32
    %3 = arith.muli %arg0, %c16_i32 : i32
    %4 = vector.broadcast %3 : i32 to vector<16x1xi32>
    %5 = arith.addi %4, %2 : vector<16x1xi32>
    %c18_i32 = arith.constant 18 : i32
    %6 = vector.broadcast %c18_i32 : i32 to vector<16x1xi32>
    %7 = arith.cmpi slt, %5, %6 : vector<16x1xi32>
    %c0_i32 = arith.constant 0 : i32
    %8 = vector.broadcast %c0_i32 : i32 to vector<16x1xi32>
    %9 = arith.cmpi ne, %1, %8 : vector<16x1xi32>
    %10 = arith.andi %7, %9 : vector<16x1xi1>
    %cst = arith.constant dense<0.000000e+00> : vector<16xf32>
    %11 = vector.multi_reduction <add>, %0, %cst [1] : vector<16x128xf32> to vector<16xf32>
    %12 = vector.shape_cast %11 : vector<16xf32> to vector<16x1xf32>
    %13 = tpu.iota {dimensions = array<i32: 1>} : vector<16x128xi32>
    %14 = vector.broadcast %1 : vector<16x1xi32> to vector<16x128xi32>
    %15 = arith.cmpi eq, %13, %14 : vector<16x128xi32>
    %cst_3 = arith.constant 0.000000e+00 : f32
    %16 = vector.broadcast %cst_3 : f32 to vector<16x128xf32>
    %17 = arith.select %15, %0, %16 : vector<16x128xi1>, vector<16x128xf32>
    %cst_4 = arith.constant dense<0.000000e+00> : vector<16xf32>
    %18 = vector.multi_reduction <add>, %17, %cst_4 [1] : vector<16x128xf32> to vector<16xf32>
    %19 = vector.shape_cast %18 : vector<16xf32> to vector<16x1xf32>
    %c0_5 = arith.constant 0 : index
    %c0_6 = arith.constant 0 : index
    %20 = vector.load %arg1[%c0_5, %c0_6] : memref<16x128xf32, #tpu.memory_space<vmem>>, vector<16x1xf32>
    %cst_7 = arith.constant 7.93650805E-4 : f32
    %21 = vector.broadcast %cst_7 : f32 to vector<16x1xf32>
    %22 = arith.mulf %21, %12 : vector<16x1xf32>
    %cst_8 = arith.constant 0.89920634 : f32
    %23 = vector.broadcast %cst_8 : f32 to vector<16x1xf32>
    %24 = arith.mulf %23, %19 : vector<16x1xf32>
    %25 = arith.addf %22, %24 : vector<16x1xf32>
    %cst_9 = arith.constant 7.93650805E-4 : f32
    %26 = vector.broadcast %cst_9 : f32 to vector<16x1xf32>
    %27 = arith.mulf %26, %20 : vector<16x1xf32>
    %28 = arith.subf %25, %27 : vector<16x1xf32>
    %cst_10 = arith.constant -0.808711171 : f32
    %29 = vector.broadcast %cst_10 : f32 to vector<16x1xf32>
    %30 = arith.subf %29, %28 : vector<16x1xf32>
    %cst_11 = arith.constant 0.000000e+00 : f32
    %31 = vector.broadcast %cst_11 : f32 to vector<16x1xf32>
    %32 = arith.select %10, %30, %31 : vector<16x1xi1>, vector<16x1xf32>
    %c0_12 = arith.constant 0 : index
    %c0_13 = arith.constant 0 : index
    %33 = vector.load %arg3[%c0_12, %c0_13] : memref<16x1xf32, #tpu.memory_space<vmem>>, vector<16x1xf32>
    tpu.vector_store %arg3[%c0_12, %c0_13], %32 {strides = array<i32>} : memref<16x1xf32, #tpu.memory_space<vmem>>, vector<16x1xf32>,
    return
  }
  func.func @transform_0(%arg0: i32) -> (i32, i32) {
    %c0_i32 = arith.constant 0 : i32
    %c0_i32_0 = arith.constant 0 : i32
    return %arg0, %c0_i32 : i32, i32
  }
  func.func @transform_1(%arg0: i32) -> (i32, i32) {
    %c0_i32 = arith.constant 0 : i32
    %c0_i32_0 = arith.constant 0 : i32
    return %arg0, %c0_i32 : i32, i32
  }
  func.func @transform_2(%arg0: i32) -> (i32, i32) {
    %c0_i32 = arith.constant 0 : i32
    %c0_i32_0 = arith.constant 0 : i32
    return %arg0, %c0_i32 : i32, i32
  }
}

</mosaic_0001>

<llo_original>
// kernel: tpu_custom_call.1
$region0: #{tpu_custom_call.1}
  #allocation0 [shape = 'u32[]', space=smem, size = 0x4, offset = 0x4, fixed_abs, tag = 'smem constant byte address 0x4 - core index']
  #allocation1 [shape = 'u32[144,128]{1,0:T(1,128)}', space=vmem, size = 0x12000, scoped, tag = 'internal scratch']
  %s0 = inlined_call_operand.vmem [shape: f32[18,128], index: 0, kind: input, shape index: {}]
  %s1 = inlined_call_operand.vmem [shape: s32[18,1], index: 1, kind: input, shape index: {}]
  %s2 = inlined_call_operand.vmem [shape: f32[18,1], index: 2, kind: output, shape index: {}]
  %s3 = sld [smem:[#allocation0]]
  $region89: #{tpu_custom_call.1} parent=0
    _
  %s5 = ssub.s32 1, %s3
  %s6 = scalar_select 0, %s5, %s3
  $region1: #{tpu_custom_call.1} parent=0
    #allocation2 [shape = 'u8[16384]{0}', space=vmem, size = 0x4000, scoped, tag = 'output window, operand 0']
    loop: start=0, step=1, limit=4
    $region2: #{tpu_custom_call.1} parent=1 // loop_pre_header
      _
    $region3: #{tpu_custom_call.1} parent=1 // loop_header
      %s8 = sphi 0, %s12
      %p9 = scmp.ge.s32.totalorder %s8, 4
      %s18 = sphi 0, %s20
      %s21 = sphi 0, %s18
      %s22 = sphi 0, %s21
      %s38 = sphi 0, %s22
      %s44 = sphi 0, %s46
      %s47 = sphi 0, %s44
      %s48 = sphi 0, %s47
      %s64 = sphi 0, %s48
      %s70 = sphi 0, %s72
      %s73 = sphi 0, %s70
      %s74 = sphi 0, %s73
      %s90 = sphi 0, %s74
    $region4: #{tpu_custom_call.1} parent=1 // loop_header_branch
      %11 = sbr.rel (%p9) target = $region8
    $region5: #{tpu_custom_call.1} parent=1 // loop_body
      %s13 = ssub.s32 %s8, 1
      %s14 = ssub.s32 %s8, 2
      %s15 = sadd.s32 %s8, 1
      %s16 = ssub.s32 %s8, %s15
      %p17 = scmp.eq.s32.totalorder %s16, 0
      %s19 = sadd.s32 %s18, 1
      %s20 = scalar_select %p17, %s18, %s19
      %p23 = pneg %p17
      %p24 = scmp.eq.s32.totalorder %s8, 1
      %p25 = por %p23, %p24
      %p26 = scmp.ne.s32.totalorder %s18, %s21
      %p27 = scmp.eq.s32.totalorder %s8, 0
      %p28 = por %p26, %p27
      %p29 = scmp.ne.s32.totalorder %s18, %s21
      %p30 = scmp.eq.s32.totalorder %s13, 1
      %p31 = por %p29, %p30
      %p32 = scmp.ne.s32.totalorder %s21, %s22
      %p33 = scmp.eq.s32.totalorder %s13, 0
      %p34 = por %p32, %p33
      %p35 = scmp.ne.s32.totalorder %s21, %s22
      %p36 = scmp.eq.s32.totalorder %s14, 1
      %p37 = por %p35, %p36
      %p39 = scmp.ne.s32.totalorder %s22, %s38
      %p40 = scmp.eq.s32.totalorder %s14, 0
      %p41 = por %p39, %p40
      %s42 = ssub.s32 %s8, %s15
      %p43 = scmp.eq.s32.totalorder %s42, 0
      %s45 = sadd.s32 %s44, 1
      %s46 = scalar_select %p43, %s44, %s45
      %p49 = pneg %p43
      %p50 = scmp.eq.s32.totalorder %s8, 1
      %p51 = por %p49, %p50
      %p52 = scmp.ne.s32.totalorder %s44, %s47
      %p53 = scmp.eq.s32.totalorder %s8, 0
      %p54 = por %p52, %p53
      %p55 = scmp.ne.s32.totalorder %s44, %s47
      %p56 = scmp.eq.s32.totalorder %s13, 1
      %p57 = por %p55, %p56
      %p58 = scmp.ne.s32.totalorder %s47, %s48
      %p59 = scmp.eq.s32.totalorder %s13, 0
      %p60 = por %p58, %p59
      %p61 = scmp.ne.s32.totalorder %s47, %s48
      %p62 = scmp.eq.s32.totalorder %s14, 1
      %p63 = por %p61, %p62
      %p65 = scmp.ne.s32.totalorder %s48, %s64
      %p66 = scmp.eq.s32.totalorder %s14, 0
      %p67 = por %p65, %p66
      %s68 = ssub.s32 %s8, %s15
      %p69 = scmp.eq.s32.totalorder %s68, 0
      %s71 = sadd.s32 %s70, 1
      %s72 = scalar_select %p69, %s70, %s71
      %p75 = pneg %p69
      %p76 = scmp.eq.s32.totalorder %s8, 1
      %p77 = por %p75, %p76
      %p78 = scmp.ne.s32.totalorder %s70, %s73
      %p79 = scmp.eq.s32.totalorder %s8, 0
      %p80 = por %p78, %p79
      %p81 = scmp.ne.s32.totalorder %s70, %s73
      %p82 = scmp.eq.s32.totalorder %s13, 1
      %p83 = por %p81, %p82
      %p84 = scmp.ne.s32.totalorder %s73, %s74
      %p85 = scmp.eq.s32.totalorder %s13, 0
      %p86 = por %p84, %p85
      %p87 = scmp.ne.s32.totalorder %s73, %s74
      %p88 = scmp.eq.s32.totalorder %s14, 1
      %p89 = por %p87, %p88
      %p91 = scmp.ne.s32.totalorder %s74, %s90
      %p92 = scmp.eq.s32.totalorder %s14, 0
      %p93 = por %p91, %p92
      %p94 = scmp.le.s32.totalorder 1, %s8
      %p95 = scmp.lt.s32.totalorder %s8, 3
      %p96 = pnand %p94, %p95
      %p97 = pneg %p96
      // Predicated region
      $region9: #{tpu_custom_call.1} parent=5 // pred_check
        _
      $region10: #{tpu_custom_call.1} parent=5 // pred_check_branch
        %99 = sbr.rel (%p96) target = $region12
      $region11: #{tpu_custom_call.1} parent=5 // pred_region
        %s100 = ssub.s32 %s8, 1
      $region12: #{tpu_custom_call.1} parent=5 // pred_fallthru
        _
      %p101 = scmp.lt.s32.totalorder %s8, 2
      // Predicated region
      $region13: #{tpu_custom_call.1} parent=5 // pred_check
        %p102 = pneg %p101
      $region14: #{tpu_custom_call.1} parent=5 // pred_check_branch
        %104 = sbr.rel (%p102) target = $region16
      $region15: #{tpu_custom_call.1} parent=5 // pred_region
        // Predicated region
        $region17: #{tpu_custom_call.1} parent=15 // pred_check
          %p105 = pneg %p28
        $region18: #{tpu_custom_call.1} parent=15 // pred_check_branch
          %107 = sbr.rel (%p105) target = $region20
        $region19: #{tpu_custom_call.1} parent=15 // pred_region
          %s108 = smul.u32 2, %s8
          %s109 = ssub.s32 3, %s108
          %p110 = scmp.lt.s32.totalorder %s109, 2
          %s111 = scalar_select %p110, %s109, 2
          %s112 = smul.u32 128, %s111
          %p113 = scmp.lt.s32.totalorder %s108, 2
          %s114 = scalar_select %p113, %s108, 2
          %s115 = smul.addr %s114, 8
          %s116 = scalar_lea.vmem %s0, %s115
          %s117 = smul.u32 2, %s8
          %s118 = ssub.s32 3, %s117
          %p119 = scmp.lt.s32.totalorder %s118, 2
          %s120 = scalar_select %p119, %s118, 2
          %s121 = smul.u32 128, %s120
        $region20: #{tpu_custom_call.1} parent=15 // pred_fallthru
          _
        // Predicated region
        $region21: #{tpu_custom_call.1} parent=15 // pred_check
          %p122 = pneg %p54
        $region22: #{tpu_custom_call.1} parent=15 // pred_check_branch
          %124 = sbr.rel (%p122) target = $region24
        $region23: #{tpu_custom_call.1} parent=15 // pred_region
          %s125 = smul.u32 2, %s8
          %s126 = ssub.s32 3, %s125
          %p127 = scmp.lt.s32.totalorder %s126, 2
          %s128 = scalar_select %p127, %s126, 2
          %s129 = smul.u32 128, %s128
          %p130 = scmp.lt.s32.totalorder %s125, 2
          %s131 = scalar_select %p130, %s125, 2
          %s132 = smul.addr %s131, 8
          %s133 = scalar_lea.vmem %s1, %s132
          %s134 = smul.u32 2, %s8
          %s135 = ssub.s32 3, %s134
          %p136 = scmp.lt.s32.totalorder %s135, 2
          %s137 = scalar_select %p136, %s135, 2
          %s138 = smul.u32 128, %s137
        $region24: #{tpu_custom_call.1} parent=15 // pred_fallthru
          _
      $region16: #{tpu_custom_call.1} parent=5 // pred_fallthru
        _
      %p139 = scmp.le.s32.totalorder 1, %s8
      %p140 = scmp.lt.s32.totalorder %s8, 3
      %p141 = pnand %p139, %p140
      %p142 = pneg %p141
      // Predicated region
      $region25: #{tpu_custom_call.1} parent=5 // pred_check
        _
      $region26: #{tpu_custom_call.1} parent=5 // pred_check_branch
        %144 = sbr.rel (%p141) target = $region28
      $region27: #{tpu_custom_call.1} parent=5 // pred_region
        %s145 = ssub.s32 %s8, 1
        %s146 = smul.u32 2, %s13
        %s147 = ssub.s32 3, %s146
        %p148 = scmp.lt.s32.totalorder %s147, 2
        %s149 = scalar_select %p148, %s147, 2
        %s150 = smul.u32 128, %s149
        %p151 = scmp.lt.s32.totalorder %s146, 2
        %s152 = scalar_select %p151, %s146, 2
        %s153 = smul.addr %s152, 8
        %s154 = scalar_lea.vmem %s0, %s153
        %p155 = pneg %p34
        %p156 = pneg %p31
        %s157 = smul.u32 2, %s13
        %s158 = ssub.s32 3, %s157
        %p159 = scmp.lt.s32.totalorder %s158, 2
        %s160 = scalar_select %p159, %s158, 2
        %s161 = smul.u32 128, %s160
        %p162 = scmp.lt.s32.totalorder %s157, 2
        %s163 = scalar_select %p162, %s157, 2
        %s164 = smul.addr %s163, 8
        %s165 = scalar_lea.vmem %s1, %s164
        %p166 = pneg %p60
        %p167 = pneg %p57
        %p168 = pneg %p86
        %p169 = pneg %p83
        %s170 = sand.u32 %s73, 1
        %s171 = sand.u32 %s73, 1
        %s172 = smul.addr %s171, 16
        %s173 = scalar_lea.vmem [#allocation2], %s172
        %s174 = smul.u32 2, %s13
        %s175 = ssub.s32 3, %s174
        %p176 = scmp.lt.s32.totalorder %s175, 2
        %s177 = scalar_select %p176, %s175, 2
        %s178 = smul.u32 128, %s177
        %p179 = scmp.lt.s32.totalorder %s174, 2
        %s180 = scalar_select %p179, %s174, 2
        %s181 = smul.addr %s180, 8
        %s182 = scalar_lea.vmem %s0, %s181
        %s183 = smul.u32 2, %s13
        %s184 = ssub.s32 3, %s183
        %p185 = scmp.lt.s32.totalorder %s184, 2
        %s186 = scalar_select %p185, %s184, 2
        %s187 = smul.u32 128, %s186
        %s188 = smul.u32 2, %s13
        %s189 = ssub.s32 3, %s188
        %p190 = scmp.lt.s32.totalorder %s189, 2
        %s191 = scalar_select %p190, %s189, 2
        %s192 = smul.u32 128, %s191
        %p193 = scmp.lt.s32.totalorder %s188, 2
        %s194 = scalar_select %p193, %s188, 2
        %s195 = smul.addr %s194, 8
        %s196 = scalar_lea.vmem %s1, %s195
        %s197 = smul.u32 2, %s13
        %s198 = ssub.s32 3, %s197
        %p199 = scmp.lt.s32.totalorder %s198, 2
        %s200 = scalar_select %p199, %s198, 2
        %s201 = smul.u32 128, %s200
        %s202 = smul.u32 2, %s13
        %s203 = ssub.s32 3, %s202
        %p204 = scmp.lt.s32.totalorder %s203, 2
        %s205 = scalar_select %p204, %s203, 2
        %s206 = smul.u32 128, %s205
        %v207 = vld [vmem:[%s182] sm:$0xff]
        %v208 = vld [vmem:[%s182 + $0x8] sm:$0xff]
        %v209 = vld [vmem:[%s196] sm:$0xff]
        %v210 = vld [vmem:[%s196 + $0x8] sm:$0xff]
        %v211 = vlaneseq
        %v212 = vshrl.u32 %v211, 7
        %v213 = vadd.s32 %v212, 8
        %s214 = smul.u32 %s13, 16
        %v215 = vstv %s214
        %v216 = vadd.s32 %v215, %v212
        %v217 = vadd.s32 %v215, %v213
        %vm218 = vcmp.lt.s32.totalorder %v216, 18
        %vm219 = vcmp.lt.s32.totalorder %v217, 18
        %vm220 = vcmp.ne.s32.totalorder %v209, 0
        %vm221 = vcmp.ne.s32.totalorder %v210, 0
        %vm222 = vmand %vm218, %vm220
        %vm223 = vmand %vm219, %vm221
        %224 = vadd.xlane.f32.xlu0 %v207
        %v225 = vpop.xlane.xlu0 %224
        %226 = vadd.xlane.f32.xlu0 %v208
        %v227 = vpop.xlane.xlu0 %226
        %v228 = vlaneseq
        %v229 = vand.u32 %v228, 127
        %230 = vset.pattern.permute.xlu0 0
        %231 = vperm.xlu0 %230, %v209
        %v232 = vpop.permute.xlu0 %231
        %233 = vset.pattern.permute.xlu0 0
        %234 = vperm.xlu0 %233, %v210
        %v235 = vpop.permute.xlu0 %234
        %vm236 = vcmp.eq.s32.totalorder %v229, %v232
        %vm237 = vcmp.eq.s32.totalorder %v229, %v235
        %v238 = vsel %vm236, %v207, 0.0
        %v239 = vsel %vm237, %v208, 0.0
        %240 = vadd.xlane.f32.xlu0 %v238
        %v241 = vpop.xlane.xlu0 %240
        %242 = vadd.xlane.f32.xlu0 %v239
        %v243 = vpop.xlane.xlu0 %242
        %v244 = vmul.f32 %v225, 0.0007936508
        %v245 = vmul.f32 %v227, 0.0007936508
        %v246 = vmul.f32 %v241, 0.89920634
        %v247 = vmul.f32 %v243, 0.89920634
        %v248 = vadd.f32 %v244, %v246
        %v249 = vadd.f32 %v245, %v247
        %v250 = vmul.f32 %v207, 0.0007936508
        %v251 = vmul.f32 %v208, 0.0007936508
        %v252 = vsub.f32 %v248, %v250
        %v253 = vsub.f32 %v249, %v251
        %v254 = vsub.f32 -0.8087112, %v252
        %v255 = vsub.f32 -0.8087112, %v253
        %v256 = vsel %vm222, %v254, 0.0
        %v257 = vsel %vm223, %v255, 0.0
        %vm258 = vcmask 7168
        %259 = vst.msk [vmem:[%s173] sm:$0xff] %vm258, %v256
        %260 = vst.msk [vmem:[%s173 + $0x8] sm:$0xff] %vm258, %v257
        %s261 = sand.u32 %s73, 1
        %s262 = sand.u32 %s73, 1
        %s263 = smul.addr %s262, 16
        %s264 = scalar_lea.vmem [#allocation2], %s263
        // Predicated region
        $region29: #{tpu_custom_call.1} parent=27 // pred_check
          %p265 = pneg %p83
        $region30: #{tpu_custom_call.1} parent=27 // pred_check_branch
          %267 = sbr.rel (%p265) target = $region32
        $region31: #{tpu_custom_call.1} parent=27 // pred_region
          %s268 = smul.u32 2, %s13
          %s269 = ssub.s32 3, %s268
          %p270 = scmp.lt.s32.totalorder %s269, 2
          %s271 = scalar_select %p270, %s269, 2
          %s272 = smul.u32 128, %s271
          %p273 = scmp.ne.s32.totalorder 0, %s272
          %s274 = smul.addr %s268, 8
          %s275 = scalar_lea.vmem %s2, %s274
          // Predicated region
          $region33: #{tpu_custom_call.1} parent=31 // pred_check
            %p276 = pneg %p273
          $region34: #{tpu_custom_call.1} parent=31 // pred_check_branch
            %278 = sbr.rel (%p276) target = $region36
          $region35: #{tpu_custom_call.1} parent=31 // pred_region
            // Predicated region
            $region37: #{tpu_custom_call.1} parent=35 // pred_check
              _
            $region38: #{tpu_custom_call.1} parent=35 // pred_check_branch
              %280 = sbr.rel (0) target = $region40
            $region39: #{tpu_custom_call.1} parent=35 // pred_region
              // Predicated region
              $region59: #{tpu_custom_call.1} parent=39 // pred_check
                _
              $region60: #{tpu_custom_call.1} parent=39 // pred_check_branch
                %331 = sbr.rel (0) target = $region62
              $region61: #{tpu_custom_call.1} parent=39 // pred_region
                %s332 = sshrl.u32 %s271, 1
                // While loop
                $region63: #{tpu_custom_call.1} parent=61 // loop_pre_header
                  _
                $region64: #{tpu_custom_call.1} parent=61 // loop_header
                  %s334 = sphi 0, %s336
                  %p335 = scmp.ge.s32.totalorder %s334, %s332
                  %s339 = sphi 0, %s348
                  %s340 = sphi %s264, %s351
                  %s341 = sphi %s275, %s352
                $region65: #{tpu_custom_call.1} parent=61 // loop_header_branch
                  %338 = sbr.rel (%p335) target = $region69
                $region66: #{tpu_custom_call.1} parent=61 // loop_body
                  %v342 = vld [vmem:[%s340] sm:$0xff]
                  %343 = vst [vmem:[%s341] sm:$0xff] %v342
                  %v344 = vld [vmem:[%s340 + $0x8] sm:$0xff]
                  %345 = vst [vmem:[%s341 + $0x8] sm:$0xff] %v344
                  %s346 = sadd.s32 1, %s339
                  %p347 = scmp.ge.s32.totalorder %s346, %s332
                  %s348 = scalar_select %p347, 0, %s346
                  %s349 = smul.u32 %s348, 16
                  %s350 = smul.u32 %s348, 16
                  %s351 = scalar_lea.vmem %s264, %s349 [#allocation2]
                  %s352 = scalar_lea.vmem %s275, %s350
                $region67: #{tpu_custom_call.1} parent=61 // loop_footer
                  %s336 = sadd.s32 %s334, 1
                $region68: #{tpu_custom_call.1} parent=61 // loop_footer_branch
                  %333 = sbr.rel target = $region64
                $region69: #{tpu_custom_call.1} parent=61 // loop_exit
                  _
                %s353 = sshrl.u32 %s271, 1
                %s354 = sand.u32 %s271, 1
                %s355 = smul.u32 %s353, 2
                %s356 = smul.u32 8, %s355
                %s357 = scalar_lea.vmem %s264, %s356 [#allocation2]
                %s358 = smul.u32 8, %s355
                %s359 = scalar_lea.vmem %s275, %s358
                // While loop
                $region70: #{tpu_custom_call.1} parent=61 // loop_pre_header
                  _
                $region71: #{tpu_custom_call.1} parent=61 // loop_header
                  %s361 = sphi 0, %s363
                  %p362 = scmp.ge.s32.totalorder %s361, %s354
                  %s366 = sphi 0, %s373
                  %s367 = sphi %s357, %s376
                  %s368 = sphi %s359, %s377
                $region72: #{tpu_custom_call.1} parent=61 // loop_header_branch
                  %365 = sbr.rel (%p362) target = $region76
                $region73: #{tpu_custom_call.1} parent=61 // loop_body
                  %v369 = vld [vmem:[%s367] sm:$0xff]
                  %370 = vst [vmem:[%s368] sm:$0xff] %v369
                  %s371 = sadd.s32 1, %s366
                  %p372 = scmp.ge.s32.totalorder %s371, %s354
                  %s373 = scalar_select %p372, 0, %s371
                  %s374 = smul.u32 %s373, 8
                  %s375 = smul.u32 %s373, 8
                  %s376 = scalar_lea.vmem %s357, %s374 [#allocation2]
                  %s377 = scalar_lea.vmem %s359, %s375
                $region74: #{tpu_custom_call.1} parent=61 // loop_footer
                  %s363 = sadd.s32 %s361, 1
                $region75: #{tpu_custom_call.1} parent=61 // loop_footer_branch
                  %360 = sbr.rel target = $region71
                $region76: #{tpu_custom_call.1} parent=61 // loop_exit
                  _
              $region62: #{tpu_custom_call.1} parent=39 // pred_fallthru
                _
              // Predicated region
              $region77: #{tpu_custom_call.1} parent=39 // pred_check
                _
              $region78: #{tpu_custom_call.1} parent=39 // pred_check_branch
                %379 = sbr.rel target = $region80
              $region79: #{tpu_custom_call.1} parent=39 // pred_region
                _
              $region80: #{tpu_custom_call.1} parent=39 // pred_fallthru
                _
            $region40: #{tpu_custom_call.1} parent=35 // pred_fallthru
              _
            // Predicated region
            $region41: #{tpu_custom_call.1} parent=35 // pred_check
              _
            $region42: #{tpu_custom_call.1} parent=35 // pred_check_branch
              %282 = sbr.rel target = $region44
            $region43: #{tpu_custom_call.1} parent=35 // pred_region
              %s284 = sshrl.u32 %s271, 1
              // While loop
              $region45: #{tpu_custom_call.1} parent=43 // loop_pre_header
                _
              $region46: #{tpu_custom_call.1} parent=43 // loop_header
                %s286 = sphi 0, %s288
                %p287 = scmp.ge.s32.totalorder %s286, %s284
                %s291 = sphi 0, %s300
                %s292 = sphi %s264, %s303
                %s293 = sphi %s275, %s304
              $region47: #{tpu_custom_call.1} parent=43 // loop_header_branch
                %290 = sbr.rel (%p287) target = $region51
              $region48: #{tpu_custom_call.1} parent=43 // loop_body
                %v294 = vld [vmem:[%s292] sm:$0xff]
                %295 = vst [vmem:[%s293] sm:$0xff] %v294
                %v296 = vld [vmem:[%s292 + $0x8] sm:$0xff]
                %297 = vst [vmem:[%s293 + $0x8] sm:$0xff] %v296
                %s298 = sadd.s32 1, %s291
                %p299 = scmp.ge.s32.totalorder %s298, %s284
                %s300 = scalar_select %p299, 0, %s298
                %s301 = smul.u32 %s300, 16
                %s302 = smul.u32 %s300, 16
                %s303 = scalar_lea.vmem %s264, %s301 [#allocation2]
                %s304 = scalar_lea.vmem %s275, %s302
              $region49: #{tpu_custom_call.1} parent=43 // loop_footer
                %s288 = sadd.s32 %s286, 1
              $region50: #{tpu_custom_call.1} parent=43 // loop_footer_branch
                %285 = sbr.rel target = $region46
              $region51: #{tpu_custom_call.1} parent=43 // loop_exit
                _
              %s305 = sshrl.u32 %s271, 1
              %s306 = sand.u32 %s271, 1
              %s307 = smul.u32 %s305, 2
              %s308 = smul.u32 8, %s307
              %s309 = scalar_lea.vmem %s264, %s308 [#allocation2]
              %s310 = smul.u32 8, %s307
              %s311 = scalar_lea.vmem %s275, %s310
              // While loop
              $region52: #{tpu_custom_call.1} parent=43 // loop_pre_header
                _
              $region53: #{tpu_custom_call.1} parent=43 // loop_header
                %s313 = sphi 0, %s315
                %p314 = scmp.ge.s32.totalorder %s313, %s306
                %s318 = sphi 0, %s325
                %s319 = sphi %s309, %s328
                %s320 = sphi %s311, %s329
              $region54: #{tpu_custom_call.1} parent=43 // loop_header_branch
                %317 = sbr.rel (%p314) target = $region58
              $region55: #{tpu_custom_call.1} parent=43 // loop_body
                %v321 = vld [vmem:[%s319] sm:$0xff]
                %322 = vst [vmem:[%s320] sm:$0xff] %v321
                %s323 = sadd.s32 1, %s318
                %p324 = scmp.ge.s32.totalorder %s323, %s306
                %s325 = scalar_select %p324, 0, %s323
                %s326 = smul.u32 %s325, 8
                %s327 = smul.u32 %s325, 8
                %s328 = scalar_lea.vmem %s309, %s326 [#allocation2]
                %s329 = scalar_lea.vmem %s311, %s327
              $region56: #{tpu_custom_call.1} parent=43 // loop_footer
                %s315 = sadd.s32 %s313, 1
              $region57: #{tpu_custom_call.1} parent=43 // loop_footer_branch
                %312 = sbr.rel target = $region53
              $region58: #{tpu_custom_call.1} parent=43 // loop_exit
                _
            $region44: #{tpu_custom_call.1} parent=35 // pred_fallthru
              _
          $region36: #{tpu_custom_call.1} parent=31 // pred_fallthru
            _
          %380 = vnop
        $region32: #{tpu_custom_call.1} parent=27 // pred_fallthru
          _
      $region28: #{tpu_custom_call.1} parent=5 // pred_fallthru
        _
      %p381 = scmp.le.s32.totalorder 2, %s8
      // Predicated region
      $region81: #{tpu_custom_call.1} parent=5 // pred_check
        %p382 = pneg %p381
      $region82: #{tpu_custom_call.1} parent=5 // pred_check_branch
        %384 = sbr.rel (%p382) target = $region84
      $region83: #{tpu_custom_call.1} parent=5 // pred_region
        %s385 = ssub.s32 %s8, 2
        // Predicated region
        $region85: #{tpu_custom_call.1} parent=83 // pred_check
          %p386 = pneg %p89
        $region86: #{tpu_custom_call.1} parent=83 // pred_check_branch
          %388 = sbr.rel (%p386) target = $region88
        $region87: #{tpu_custom_call.1} parent=83 // pred_region
          %s389 = sand.u32 %s74, 1
          %s390 = sand.u32 %s74, 1
          %s391 = smul.addr %s390, 16
          %s392 = scalar_lea.vmem [#allocation2], %s391
        $region88: #{tpu_custom_call.1} parent=83 // pred_fallthru
          _
      $region84: #{tpu_custom_call.1} parent=5 // pred_fallthru
        _
    $region6: #{tpu_custom_call.1} parent=1 // loop_footer
      %s12 = sadd.s32 1, %s8
    $region7: #{tpu_custom_call.1} parent=1 // loop_footer_branch
      %7 = sbr.rel target = $region3
    $region8: #{tpu_custom_call.1} parent=1 // loop_exit
      _

</llo_original>
